<compile_context>
chip_gen: v5e
topology: v5e:2x2
jax: 0.10.0
libtpu: 0.0.40
codegen_flags: <defaults>
</compile_context>

<pallas_src>
import jax
import jax.numpy as jnp
from jax import lax
from jax.experimental import pallas as pl
from jax.experimental.pallas import tpu as pltpu

BN_EPS = 1e-5


def _couplerc_kernel(z_ref, w1_ref, wh_ref, vec_ref, out_ref):
    z = z_ref[...].astype(jnp.float32)
    inv_b = jnp.float32(1.0 / z.shape[0])

    # fc1: Linear(z_dim, z_dim) on the MXU. Bias omitted (cancelled by BN).
    h = jnp.dot(z, w1_ref[...], preferred_element_type=jnp.float32)
    d = h.shape[1]

    # BatchNorm1d (train mode): one-pass batch stats (sum, sum-of-squares),
    # folded into a single per-feature scale/shift. Clamp var >= 0 to guard
    # against catastrophic cancellation before rsqrt.
    s = jnp.sum(h, axis=0, keepdims=True)
    ss = jnp.sum(h * h, axis=0, keepdims=True)
    mu = s * inv_b
    var = jnp.maximum(ss * inv_b - mu * mu, 0.0)      # biased variance, >= 0

    # Packed per-feature vectors: row 0 = gamma, row 1 = beta,
    # row 2 = fused head bias (padded to the lane-dense output width).
    vecs = vec_ref[...]
    gamma = vecs[0:1, :d]
    beta = vecs[1:2, :d]
    b_heads = vecs[2:3, :]

    scale = gamma * lax.rsqrt(var + BN_EPS)            # rsqrt -> EUP slot
    shift = beta - mu * scale

    # Fused normalize + affine + ReLU: one elementwise pass over [B, D].
    h = jnp.maximum(h * scale + shift, 0.0)

    # Fused mean|log_var heads: single [D, N_pad] matmul, lane-dense
    # (>=128-wide) [B, N_pad] store.
    out = jnp.dot(h, wh_ref[...], preferred_element_type=jnp.float32) + b_heads
    out_ref[...] = out.astype(out_ref.dtype)


def prepare_params(params):
    """One-time parameter glue hoisted out of the per-call path.

    * Transposes PyTorch Linear weights (out,in) -> (in,out).
    * Drops the fc1 bias (exactly cancelled by train-mode BatchNorm).
    * Concatenates the two head weights into a fused [D, 2D] head and
      zero-pads it on the lane axis to N_pad = max(128, roundup(2D, 128))
      so the kernel's output store is lane-dense.
    * Packs gamma / beta / fused-head-bias into a single [3, N_pad] operand.
    """
    w1 = jnp.asarray(params["w1"], jnp.float32)
    d = w1.shape[0]
    n_pad = max(128, ((2 * d + 127) // 128) * 128)

    w_heads = jnp.concatenate(
        [jnp.asarray(params["wm"], jnp.float32).T,
         jnp.asarray(params["wv"], jnp.float32).T], axis=1)        # [D, 2D]
    w_heads = jnp.pad(w_heads, ((0, 0), (0, n_pad - 2 * d)))       # [D, N_pad]

    b_heads = jnp.concatenate(
        [jnp.asarray(params["bm"], jnp.float32),
         jnp.asarray(params["bv"], jnp.float32)])                  # [2D]

    vecs = jnp.zeros((3, n_pad), jnp.float32)
    vecs = vecs.at[0, :d].set(jnp.asarray(params["gamma"], jnp.float32))
    vecs = vecs.at[1, :d].set(jnp.asarray(params["beta"], jnp.float32))
    vecs = vecs.at[2, :2 * d].set(b_heads)

    return {"w1": w1.T, "w_heads": w_heads, "vecs": vecs}


def couplerc_forward(z, prepared):
    """z: [B, D] float32. prepared: output of prepare_params()."""
    B, D = z.shape
    n_pad = prepared["w_heads"].shape[1]
    vmem = pl.BlockSpec(memory_space=pltpu.MemorySpace.VMEM)

    out = pl.pallas_call(
        _couplerc_kernel,
        out_shape=jax.ShapeDtypeStruct((B, n_pad), z.dtype),
        in_specs=[vmem] * 4,
        out_specs=vmem,
    )(z, prepared["w1"], prepared["w_heads"], prepared["vecs"])

    # Split the fused, lane-padded output outside the kernel (cheap slices).
    return out[:, :D], out[:, D:2 * D]


def init_params(key, z_dim):
    """Deterministic parameter init (PyTorch-like uniform bounds)."""
    ks = jax.random.split(key, 6)
    bound = 1.0 / jnp.sqrt(z_dim)

    def lin(kw, kb):
        w = jax.random.uniform(kw, (z_dim, z_dim), jnp.float32, -bound, bound)
        b = jax.random.uniform(kb, (z_dim,), jnp.float32, -bound, bound)
        return w, b

    w1, b1 = lin(ks[0], ks[1])
    wm, bm = lin(ks[2], ks[3])
    wv, bv = lin(ks[4], ks[5])
    return {
        "w1": w1, "b1": b1,
        "gamma": jnp.ones((z_dim,), jnp.float32),   # BatchNorm1d weight init
        "beta": jnp.zeros((z_dim,), jnp.float32),   # BatchNorm1d bias init
        "wm": wm, "bm": bm,
        "wv": wv, "bv": bv,
    }


def _reference(z, p):
    """Plain-JAX reference matching the PyTorch module (train-mode BN).

    Note: includes the fc1 bias b1; the kernel omits it because train-mode
    BatchNorm cancels it exactly.
    """
    h = z @ p["w1"].T + p["b1"]
    mu = h.mean(axis=0, keepdims=True)
    var = ((h - mu) ** 2).mean(axis=0, keepdims=True)
    h = (h - mu) / jnp.sqrt(var + BN_EPS) * p["gamma"] + p["beta"]
    h = jnp.maximum(h, 0.0)
    return h @ p["wm"].T + p["bm"], h @ p["wv"].T + p["bv"]


if __name__ == "__main__":
    B, Z_DIM = 8, 32
    key = jax.random.PRNGKey(0)
    k_z, k_p = jax.random.split(key)

    z = jax.random.normal(k_z, (B, Z_DIM), jnp.float32)
    params = init_params(k_p, Z_DIM)

    # One-time glue (done once per model, not per forward call).
    prepared = jax.block_until_ready(prepare_params(params))

    mean, log_var = couplerc_forward(z, prepared)
    jax.block_until_ready((mean, log_var))

    ref_mean, ref_lv = _reference(z, params)
    assert jnp.allclose(mean, ref_mean, atol=1e-4, rtol=1e-4)
    assert jnp.allclose(log_var, ref_lv, atol=1e-4, rtol=1e-4)

    print("KERNEL_OK")
</pallas_src>

<mosaic_0001>
module attributes {stable_mosaic.version = 11 : i64} {
  func.func @_couplerc_kernel(%arg0: memref<8x32xf32, #tpu.memory_space<vmem>>, %arg1: memref<32x32xf32, #tpu.memory_space<vmem>>, %arg2: memref<32x128xf32, #tpu.memory_space<vmem>>, %arg3: memref<3x128xf32, #tpu.memory_space<vmem>>, %arg4: memref<8x128xf32, #tpu.memory_space<vmem>>) attributes {dimension_semantics = [], scalar_prefetch = 0 : i64, scratch_operands = 0 : i64, tpu.core_type = #tpu.core_type<tc>} {
    %c0 = arith.constant 0 : index
    %c0_0 = arith.constant 0 : index
    %0 = vector.load %arg0[%c0, %c0_0] : memref<8x32xf32, #tpu.memory_space<vmem>>, vector<8x32xf32>
    %c0_1 = arith.constant 0 : index
    %c0_2 = arith.constant 0 : index
    %1 = vector.load %arg1[%c0_1, %c0_2] : memref<32x32xf32, #tpu.memory_space<vmem>>, vector<32x32xf32>
    %cst = arith.constant dense<0.000000e+00> : vector<8x32xf32>
    %2 = tpu.matmul %0, %1, %cst {dimension_numbers = #tpu.dot_dimension_numbers<[1], [0], [0], [1], [0, 0, 1, 1], [], []>} : vector<8x32xf32>, vector<32x32xf32>, vector<8x32xf32> -> vector<8x32xf32>
    %cst_3 = arith.constant dense<0.000000e+00> : vector<32xf32>
    %3 = vector.multi_reduction <add>, %2, %cst_3 [0] : vector<8x32xf32> to vector<32xf32>
    %4 = vector.shape_cast %3 : vector<32xf32> to vector<1x32xf32>
    %5 = arith.mulf %2, %2 : vector<8x32xf32>
    %cst_4 = arith.constant dense<0.000000e+00> : vector<32xf32>
    %6 = vector.multi_reduction <add>, %5, %cst_4 [0] : vector<8x32xf32> to vector<32xf32>
    %7 = vector.shape_cast %6 : vector<32xf32> to vector<1x32xf32>
    %cst_5 = arith.constant 1.250000e-01 : f32
    %8 = vector.broadcast %cst_5 : f32 to vector<1x32xf32>
    %9 = arith.mulf %4, %8 : vector<1x32xf32>
    %cst_6 = arith.constant 1.250000e-01 : f32
    %10 = vector.broadcast %cst_6 : f32 to vector<1x32xf32>
    %11 = arith.mulf %7, %10 : vector<1x32xf32>
    %12 = arith.mulf %9, %9 : vector<1x32xf32>
    %13 = arith.subf %11, %12 : vector<1x32xf32>
    %cst_7 = arith.constant 0.000000e+00 : f32
    %14 = vector.broadcast %cst_7 : f32 to vector<1x32xf32>
    %15 = arith.maximumf %13, %14 : vector<1x32xf32>
    %c0_8 = arith.constant 0 : index
    %c0_9 = arith.constant 0 : index
    %16 = vector.load %arg3[%c0_8, %c0_9] : memref<3x128xf32, #tpu.memory_space<vmem>>, vector<3x128xf32>
    %17 = vector.extract_strided_slice %16 {offsets = [0, 0], sizes = [1, 32], strides = [1, 1]} : vector<3x128xf32> to vector<1x32xf32>
    %18 = vector.extract_strided_slice %16 {offsets = [1, 0], sizes = [1, 32], strides = [1, 1]} : vector<3x128xf32> to vector<1x32xf32>
    %19 = vector.extract_strided_slice %16 {offsets = [2, 0], sizes = [1, 128], strides = [1, 1]} : vector<3x128xf32> to vector<1x128xf32>
    %cst_10 = arith.constant 9.99999974E-6 : f32
    %20 = vector.broadcast %cst_10 : f32 to vector<1x32xf32>
    %21 = arith.addf %15, %20 : vector<1x32xf32>
    %22 = math.rsqrt %21 : vector<1x32xf32>
    %23 = arith.mulf %17, %22 : vector<1x32xf32>
    %24 = arith.mulf %9, %23 : vector<1x32xf32>
    %25 = arith.subf %18, %24 : vector<1x32xf32>
    %26 = vector.broadcast %23 : vector<1x32xf32> to vector<8x32xf32>
    %27 = arith.mulf %2, %26 : vector<8x32xf32>
    %28 = vector.broadcast %25 : vector<1x32xf32> to vector<8x32xf32>
    %29 = arith.addf %27, %28 : vector<8x32xf32>
    %cst_11 = arith.constant 0.000000e+00 : f32
    %30 = vector.broadcast %cst_11 : f32 to vector<8x32xf32>
    %31 = arith.maximumf %29, %30 : vector<8x32xf32>
    %c0_12 = arith.constant 0 : index
    %c0_13 = arith.constant 0 : index
    %32 = vector.load %arg2[%c0_12, %c0_13] : memref<32x128xf32, #tpu.memory_space<vmem>>, vector<32x128xf32>
    %cst_14 = arith.constant dense<0.000000e+00> : vector<8x128xf32>
    %33 = tpu.matmul %31, %32, %cst_14 {dimension_numbers = #tpu.dot_dimension_numbers<[1], [0], [0], [1], [0, 0, 1, 1], [], []>} : vector<8x32xf32>, vector<32x128xf32>, vector<8x128xf32> -> vector<8x128xf32>
    %34 = vector.broadcast %19 : vector<1x128xf32> to vector<8x128xf32>
    %35 = arith.addf %33, %34 : vector<8x128xf32>
    %c0_15 = arith.constant 0 : index
    %c0_16 = arith.constant 0 : index
    %36 = vector.load %arg4[%c0_15, %c0_16] : memref<8x128xf32, #tpu.memory_space<vmem>>, vector<8x128xf32>
    tpu.vector_store %arg4[%c0_15, %c0_16], %35 {strides = array<i32>} : memref<8x128xf32, #tpu.memory_space<vmem>>, vector<8x128xf32>,
    return
  }
}

</mosaic_0001>

<llo_original>
// kernel: tpu_custom_call.1
$region0: #{tpu_custom_call.1}
  #allocation0 [shape = 'u32[]', space=smem, size = 0x4, offset = 0x4, fixed_abs, tag = 'smem constant byte address 0x4 - core index']
  #allocation1 [shape = 'u32[72,128]{1,0:T(1,128)}', space=vmem, size = 0x9000, scoped, tag = 'internal scratch']
  %s0 = inlined_call_operand.hbm [shape: f32[8,32], index: 0, kind: input, shape index: {}]
  %s1 = inlined_call_operand.hbm [shape: f32[32,32], index: 1, kind: input, shape index: {}]
  %s2 = inlined_call_operand.hbm [shape: f32[32,128], index: 2, kind: input, shape index: {}]
  %s3 = inlined_call_operand.hbm [shape: f32[3,128], index: 3, kind: input, shape index: {}]
  %s4 = inlined_call_operand.hbm [shape: f32[8,128], index: 4, kind: output, shape index: {}]
  %s5 = sld [smem:[#allocation0]]
  $region42: #{tpu_custom_call.1} parent=0
    _
  %s7 = ssub.s32 1, %s5
  %s8 = scalar_select 0, %s7, %s5
  $region1: #{tpu_custom_call.1} parent=0
    #allocation2 [shape = 'u8[4096]{0}', space=vmem, size = 0x1000, scoped, tag = 'input window, operand 0, single buffered']
    #allocation3 [shape = 's32[1]{0}', space=sflag, size = 0x4, scoped, tag = 'scoped memory for tpu_custom_call.1']
    #allocation4 [shape = 's32[1]{0}', space=sflag, size = 0x4, scoped, tag = 'scoped memory for tpu_custom_call.1']
    #allocation5 [shape = 'u8[16384]{0}', space=vmem, size = 0x4000, scoped, tag = 'input window, operand 1, single buffered']
    #allocation6 [shape = 's32[1]{0}', space=sflag, size = 0x4, scoped, tag = 'scoped memory for tpu_custom_call.1']
    #allocation7 [shape = 'u8[16384]{0}', space=vmem, size = 0x4000, scoped, tag = 'input window, operand 2, single buffered']
    #allocation8 [shape = 'u8[2048]{0}', space=vmem, size = 0x800, scoped, tag = 'input window, operand 3, single buffered']
    #allocation9 [shape = 's32[1]{0}', space=sflag, size = 0x4, scoped, tag = 'scoped memory for tpu_custom_call.1']
    #allocation10 [shape = 'u8[4096]{0}', space=vmem, size = 0x1000, scoped, tag = 'output window, operand 0, single buffered']
    %9 = vsyncpa [#allocation3], 0
    %10 = vsyncpa [#allocation6], 0
    %11 = vsyncpa [#allocation9], 0
    %12 = vsyncpa [#allocation4], 0
    // Predicated region
    $region2: #{tpu_custom_call.1} parent=1 // pred_check
      _
    $region3: #{tpu_custom_call.1} parent=1 // pred_check_branch
      %14 = sbr.rel (0) target = $region5
    $region4: #{tpu_custom_call.1} parent=1 // pred_region
      %16 = vsyncadd [#allocation3], 0
      %s18 = sshll.u32 %s0, 4
      %s19 = int_to_ptr.hbm [resolvable:$true] %s18
      %s20 = sshll.u32 [#allocation2], 4
      %s21 = int_to_ptr.vmem [resolvable:$true] %s20
      %23 = dma.hbm_to_vmem [thread:$0]  %s19, 128, %s21, [#allocation3]
    $region5: #{tpu_custom_call.1} parent=1 // pred_fallthru
      _
    // Predicated region
    $region6: #{tpu_custom_call.1} parent=1 // pred_check
      _
    $region7: #{tpu_custom_call.1} parent=1 // pred_check_branch
      %25 = sbr.rel (0) target = $region9
    $region8: #{tpu_custom_call.1} parent=1 // pred_region
      %27 = vsyncadd [#allocation6], 0
      %s28 = sshll.u32 %s1, 4
      %s29 = int_to_ptr.hbm [resolvable:$true] %s28
      %s30 = sshll.u32 [#allocation5], 4
      %s31 = int_to_ptr.vmem [resolvable:$true] %s30
      %36 = dma.hbm_to_vmem [thread:$0]  %s29, 512, %s31, [#allocation6], 128, 128, 8
    $region9: #{tpu_custom_call.1} parent=1 // pred_fallthru
      _
    // Predicated region
    $region10: #{tpu_custom_call.1} parent=1 // pred_check
      _
    $region11: #{tpu_custom_call.1} parent=1 // pred_check_branch
      %38 = sbr.rel (0) target = $region13
    $region12: #{tpu_custom_call.1} parent=1 // pred_region
      %40 = vsyncadd [#allocation6], 0
      %s41 = sshll.u32 %s2, 4
      %s42 = int_to_ptr.hbm [resolvable:$true] %s41
      %s43 = sshll.u32 [#allocation7], 4
      %s44 = int_to_ptr.vmem [resolvable:$true] %s43
      %49 = dma.hbm_to_vmem [thread:$0]  %s42, 512, %s44, [#allocation6], 128, 128, 8
    $region13: #{tpu_custom_call.1} parent=1 // pred_fallthru
      _
    // Predicated region
    $region14: #{tpu_custom_call.1} parent=1 // pred_check
      _
    $region15: #{tpu_custom_call.1} parent=1 // pred_check_branch
      %51 = sbr.rel (0) target = $region17
    $region16: #{tpu_custom_call.1} parent=1 // pred_region
      %53 = vsyncadd [#allocation9], 0
      %s55 = sshll.u32 %s3, 4
      %s56 = int_to_ptr.hbm [resolvable:$true] %s55
      %s57 = sshll.u32 [#allocation8], 4
      %s58 = int_to_ptr.vmem [resolvable:$true] %s57
      %60 = dma.hbm_to_vmem [thread:$0]  %s56, 64, %s58, [#allocation9]
    $region17: #{tpu_custom_call.1} parent=1 // pred_fallthru
      _
    // Predicated region
    $region18: #{tpu_custom_call.1} parent=1 // pred_check
      _
    $region19: #{tpu_custom_call.1} parent=1 // pred_check_branch
      %62 = sbr.rel (0) target = $region21
    $region20: #{tpu_custom_call.1} parent=1 // pred_region
      %64 = dma.done [#allocation3], 128
    $region21: #{tpu_custom_call.1} parent=1 // pred_fallthru
      _
    // Predicated region
    $region22: #{tpu_custom_call.1} parent=1 // pred_check
      _
    $region23: #{tpu_custom_call.1} parent=1 // pred_check_branch
      %66 = sbr.rel (0) target = $region25
    $region24: #{tpu_custom_call.1} parent=1 // pred_region
      %68 = dma.done [#allocation6], 512
    $region25: #{tpu_custom_call.1} parent=1 // pred_fallthru
      _
    // Predicated region
    $region26: #{tpu_custom_call.1} parent=1 // pred_check
      _
    $region27: #{tpu_custom_call.1} parent=1 // pred_check_branch
      %70 = sbr.rel (0) target = $region29
    $region28: #{tpu_custom_call.1} parent=1 // pred_region
      %72 = dma.done [#allocation6], 512
    $region29: #{tpu_custom_call.1} parent=1 // pred_fallthru
      _
    // Predicated region
    $region30: #{tpu_custom_call.1} parent=1 // pred_check
      _
    $region31: #{tpu_custom_call.1} parent=1 // pred_check_branch
      %74 = sbr.rel (0) target = $region33
    $region32: #{tpu_custom_call.1} parent=1 // pred_region
      %76 = dma.done [#allocation9], 64
    $region33: #{tpu_custom_call.1} parent=1 // pred_fallthru
      _
    %v77 = vld [vmem:[#allocation2] sm:$0xff]
    %v78 = vld [vmem:[#allocation5] sm:$0xff]
    %v79 = vld [vmem:[#allocation5 + $0x8] sm:$0xff]
    %v80 = vld [vmem:[#allocation5 + $0x10] sm:$0xff]
    %v81 = vld [vmem:[#allocation5 + $0x18] sm:$0xff]
    %vm82 = vcmask 261120
    %v84 = vsel %vm82, %v77, 0
    %86 = vmatpush.msra.mxu0 0.0
    %87 = vmatpush.msra.mxu0 0.0
    %88 = vmatpush.msra.mxu0 0.0
    %89 = vmatpush.msra.mxu0 0.0
    %90 = vmatpush.msra.mxu0 0.0
    %91 = vmatpush.msra.mxu0 0.0
    %92 = vmatpush.msra.mxu0 0.0
    %93 = vmatpush.msra.mxu0 0.0
    %94 = vmatpush.msra.mxu0 0.0
    %95 = vmatpush.msra.mxu0 0.0
    %96 = vmatpush.msra.mxu0 0.0
    %97 = vmatpush.msra.mxu0 0.0
    %98 = vmatpush.msra.mxu0 %v81
    %99 = vmatpush.msra.mxu0 %v80
    %100 = vmatpush.msra.mxu0 %v79
    %101 = vmatpush.msra.mxu0 %v78
    %102 = vmatmul.f32.gmra.mxu0 %v84
    %v103 = vpop.f32.mrf.mxu0
    %v104 = vadd.f32 0.0, %v103
    %105 = vdwg.mxu0
    %v106 = vsel %vm82, %v104, 0.0
    %v107 = vrot.slane %v106, 4
    %v108 = vadd.f32 %v106, %v107
    %v109 = vrot.slane %v108, 2
    %v110 = vadd.f32 %v108, %v109
    %v111 = vrot.slane %v110, 1
    %v112 = vadd.f32 %v110, %v111
    %v113 = vmul.f32 %v104, %v104
    %v114 = vsel %vm82, %v113, 0.0
    %v115 = vrot.slane %v114, 4
    %v116 = vadd.f32 %v114, %v115
    %v117 = vrot.slane %v116, 2
    %v118 = vadd.f32 %v116, %v117
    %v119 = vrot.slane %v118, 1
    %v120 = vadd.f32 %v118, %v119
    %v121 = vmul.f32 %v112, 0.125
    %v122 = vmul.f32 %v120, 0.125
    %v123 = vmul.f32 %v121, %v121
    %v124 = vsub.f32 %v122, %v123
    %v125 = vmax.f32 %v124, 0.0
    %v126 = vld [vmem:[#allocation8] sm:$0x7]
    %v127 = vadd.f32 %v125, 1e-05
    %v128 = vrsqrt.pop %v127
    %v129 = vmul.f32 %v128, %v127
    %v130 = vmul.f32 %v129, %v128
    %v131 = vmul.f32 0.5, %v130
    %v132 = vsub.f32 1.5, %v131
    %v133 = vmul.f32 %v128, %v132
    %vm134 = vweird.f32 %v127
    %vm135 = vweird.f32 %v128
    %vm136 = vmor %vm134, %vm135
    %v137 = vsel %vm136, %v128, %v133
    %v138 = vmul.f32 %v126, %v137
    %v139 = vmul.f32 %v121, %v138
    %v141 = vrot.slane %v139, 7
    %v143 = vsub.f32 %v126, %v141
    %v144 = vperm.slane %v138, 0
    %v145 = vmul.f32 %v104, %v144
    %v146 = vperm.slane %v143, 1
    %v147 = vadd.f32 %v145, %v146
    %v148 = vmax.f32 %v147, 0.0
    %v149 = vld [vmem:[#allocation7] sm:$0xff]
    %v150 = vld [vmem:[#allocation7 + $0x8] sm:$0xff]
    %v151 = vld [vmem:[#allocation7 + $0x10] sm:$0xff]
    %v152 = vld [vmem:[#allocation7 + $0x18] sm:$0xff]
    %v153 = vperm.slane %v126, 2
    %v155 = vsel %vm82, %v148, 0
    %157 = vmatpush.msra.mxu0 0.0
    %158 = vmatpush.msra.mxu0 0.0
    %159 = vmatpush.msra.mxu0 0.0
    %160 = vmatpush.msra.mxu0 0.0
    %161 = vmatpush.msra.mxu0 0.0
    %162 = vmatpush.msra.mxu0 0.0
    %163 = vmatpush.msra.mxu0 0.0
    %164 = vmatpush.msra.mxu0 0.0
    %165 = vmatpush.msra.mxu0 0.0
    %166 = vmatpush.msra.mxu0 0.0
    %167 = vmatpush.msra.mxu0 0.0
    %168 = vmatpush.msra.mxu0 0.0
    %169 = vmatpush.msra.mxu0 %v152
    %170 = vmatpush.msra.mxu0 %v151
    %171 = vmatpush.msra.mxu0 %v150
    %172 = vmatpush.msra.mxu0 %v149
    %173 = vmatmul.f32.gmra.mxu0 %v155
    %v174 = vpop.f32.mrf.mxu0
    %v175 = vadd.f32 %v153, %v174
    %176 = vdwg.mxu0
    %177 = vst [vmem:[#allocation10] sm:$0xff] %v175
    // Predicated region
    $region34: #{tpu_custom_call.1} parent=1 // pred_check
      _
    $region35: #{tpu_custom_call.1} parent=1 // pred_check_branch
      %179 = sbr.rel (0) target = $region37
    $region36: #{tpu_custom_call.1} parent=1 // pred_region
      %181 = vsyncadd [#allocation4], 0
      %s183 = sshll.u32 [#allocation10], 4
      %s184 = int_to_ptr.vmem [resolvable:$true] %s183
      %s185 = sshll.u32 %s4, 4
      %s186 = int_to_ptr.hbm [resolvable:$true] %s185
      %188 = dma.vmem_to_hbm [thread:$0]  %s184, 128, %s186, [#allocation4]
    $region37: #{tpu_custom_call.1} parent=1 // pred_fallthru
      _
    // Predicated region
    $region38: #{tpu_custom_call.1} parent=1 // pred_check
      _
    $region39: #{tpu_custom_call.1} parent=1 // pred_check_branch
      %190 = sbr.rel (0) target = $region41
    $region40: #{tpu_custom_call.1} parent=1 // pred_region
      %192 = dma.done [#allocation4], 128
    $region41: #{tpu_custom_call.1} parent=1 // pred_fallthru
      _
    %193 = vsyncpa [#allocation3], 1
    %194 = vsyncpa [#allocation6], 1
    %195 = vsyncpa [#allocation9], 1
    %196 = vsyncpa [#allocation4], 1

</llo_original>
